<compile_context>
chip_gen: v5e
topology: v5e:2x2
jax: 0.10.0
libtpu: 0.0.40
codegen_flags: <defaults>
</compile_context>

<pallas_src>
import functools

import jax
import jax.numpy as jnp
from jax import lax
from jax.experimental import pallas as pl
from jax.experimental.pallas import tpu as pltpu


def _round_up(x, m):
    return (x + m - 1) // m * m


def _contrastive_loss_kernel(ri_ref, rip_ref, w1_ref, w2_ref, b1_ref, b2_ref,
                             out_ref, zi_acc, zip_acc, *, temperature):
    eps = 1e-07
    k = pl.program_id(0)
    nk = pl.num_programs(0)

    @pl.when(k == 0)
    def _():
        zi_acc[...] = jnp.zeros_like(zi_acc)
        zip_acc[...] = jnp.zeros_like(zip_acc)

    # Projection matmuls, accumulated over K tiles (MXU, f32 accumulation).
    zi_acc[...] += jnp.dot(ri_ref[...], w1_ref[...],
                           preferred_element_type=jnp.float32)
    zip_acc[...] += jnp.dot(rip_ref[...], w2_ref[...],
                            preferred_element_type=jnp.float32)

    @pl.when(k == nk - 1)
    def _():
        inv_t = 1.0 / temperature
        zi = jnp.maximum(zi_acc[...] + b1_ref[...], 0.0)      # [B, P_pad]
        zip_ = jnp.maximum(zip_acc[...] + b2_ref[...], 0.0)   # [B, P_pad]

        # [B, B] logits: contraction expressed directly (no .T / relayout).
        prod = lax.dot_general(zi, zip_, (((1,), (1,)), ((), ())),
                               preferred_element_type=jnp.float32) * inv_t
        exp_sum = jnp.sum(jnp.exp(prod), axis=-1, keepdims=True)   # [B, 1]

        # Diagonal logits directly via a row-wise dot: drops the B^2 divide,
        # the iota/where mask, and the full ratio matrix.
        diag_prod = jnp.sum(zi * zip_, axis=-1, keepdims=True) * inv_t
        diag_ratio = jnp.exp(diag_prod) * pl.reciprocal(exp_sum, approx=False)

        # F.relu(diag) is a no-op on positive softmax values; kept for fidelity.
        loss = -1.0 * jnp.sum(jnp.log(jnp.maximum(diag_ratio, 0.0) + eps))
        out_ref[0, 0] = loss


def contrastive_loss(ri, ri_prime, w1, b1, w2, b2, temperature, *, k_tile=512):
    """Wrapper: flatten + pad inputs, call the tiled Pallas kernel, return scalar."""
    B = ri.shape[0]
    ri = ri.reshape(B, -1)
    ri_prime = ri_prime.reshape(B, -1)
    K = ri.shape[1]
    P = w1.shape[1]

    # Lane-dense padding (see header comment).
    P_pad = _round_up(P, 128)
    K_pad = _round_up(K, 128)
    k_tile = min(k_tile, K_pad)
    K_pad = _round_up(K_pad, k_tile)
    nk = K_pad // k_tile

    # Keep original dtype for the matmul operands (bf16 halves HBM traffic);
    # only biases are promoted to f32 since they join the f32 accumulators.
    ri_p = jnp.pad(ri, ((0, 0), (0, K_pad - K)))
    rip_p = jnp.pad(ri_prime, ((0, 0), (0, K_pad - K)))
    w1_p = jnp.pad(w1, ((0, K_pad - K), (0, P_pad - P)))
    w2_p = jnp.pad(w2, ((0, K_pad - K), (0, P_pad - P)))
    b1_p = jnp.pad(b1.reshape(1, -1).astype(jnp.float32),
                   ((0, 0), (0, P_pad - P)))
    b2_p = jnp.pad(b2.reshape(1, -1).astype(jnp.float32),
                   ((0, 0), (0, P_pad - P)))

    kernel = functools.partial(_contrastive_loss_kernel,
                               temperature=float(temperature))

    # VMEM budget: double-buffered input tiles + persistent scratch + [B,B]
    # intermediates.  Floor at the default scoped limit, cap below v7x's
    # 64 MiB physical VMEM.
    in_isz = jnp.dtype(ri_p.dtype).itemsize
    w_isz = jnp.dtype(w1_p.dtype).itemsize
    vmem_est = (2 * 2 * B * k_tile * in_isz
                + 2 * 2 * k_tile * P_pad * w_isz
                + 2 * 2 * P_pad * 4
                + 2 * B * P_pad * 4          # zi/zi' accumulators
                + 4 * B * P_pad * 4          # relu'd copies / temporaries
                + 3 * B * B * 4)             # logits / exp block
    vmem_limit = int(min(max(vmem_est + (4 << 20), 32 << 20), 56 << 20))

    cost = pl.CostEstimate(
        flops=int(2 * (2 * B * K_pad * P_pad) + 2 * B * B * P_pad),
        transcendentals=int(B * B + 2 * B),
        bytes_accessed=int(ri_p.nbytes + rip_p.nbytes + w1_p.nbytes
                           + w2_p.nbytes + b1_p.nbytes + b2_p.nbytes + 4),
    )

    out = pl.pallas_call(
        kernel,
        out_shape=jax.ShapeDtypeStruct((1, 1), jnp.float32),
        grid_spec=pltpu.PrefetchScalarGridSpec(
            num_scalar_prefetch=0,
            grid=(nk,),
            in_specs=[
                pl.BlockSpec((B, k_tile), lambda k: (0, k)),       # ri
                pl.BlockSpec((B, k_tile), lambda k: (0, k)),       # ri_prime
                pl.BlockSpec((k_tile, P_pad), lambda k: (k, 0)),   # W1
                pl.BlockSpec((k_tile, P_pad), lambda k: (k, 0)),   # W2
                pl.BlockSpec((1, P_pad), lambda k: (0, 0)),        # b1
                pl.BlockSpec((1, P_pad), lambda k: (0, 0)),        # b2
            ],
            out_specs=pl.BlockSpec((1, 1), lambda k: (0, 0),
                                   memory_space=pltpu.MemorySpace.SMEM),
            scratch_shapes=[pltpu.VMEM((B, P_pad), jnp.float32),
                            pltpu.VMEM((B, P_pad), jnp.float32)],
        ),
        compiler_params=pltpu.CompilerParams(
            dimension_semantics=("arbitrary",),
            vmem_limit_bytes=vmem_limit),
        cost_estimate=cost,
    )(ri_p, rip_p, w1_p, w2_p, b1_p, b2_p)
    return out[0, 0]


def reference_loss(ri, ri_prime, w1, b1, w2, b2, temperature):
    """Plain-JAX reference mirroring the PyTorch module."""
    eps = 1e-07
    B = ri.shape[0]
    ri = ri.reshape(B, -1)
    ri_prime = ri_prime.reshape(B, -1)
    zi = jnp.maximum(ri @ w1 + b1.reshape(1, -1), 0.0)
    zi_prime = jnp.maximum(ri_prime @ w2 + b2.reshape(1, -1), 0.0)
    prod = (zi @ zi_prime.T) / temperature
    exp_prod = jnp.exp(prod)
    ratio = exp_prod / jnp.sum(exp_prod, axis=-1, keepdims=True)
    diag = jnp.diagonal(ratio)
    return -1.0 * jnp.sum(jnp.log(jnp.maximum(diag, 0.0) + eps))


if __name__ == "__main__":
    # Small shapes: batch=8, seq=4, hidden=8  ->  input_dim = 32
    B, S, H = 8, 4, 8
    input_dim = S * H
    proj_head_dim = 16
    temperature = 0.5

    key = jax.random.PRNGKey(0)
    k_ri, k_rip, k_w1, k_b1, k_w2, k_b2 = jax.random.split(key, 6)

    ri = jax.random.normal(k_ri, (B, S, H), dtype=jnp.float32)
    ri_prime = jax.random.normal(k_rip, (B, S, H), dtype=jnp.float32)

    # Deterministic parameter init (shapes from nn.Linear(input_dim, proj_head_dim)).
    scale = 1.0 / jnp.sqrt(jnp.float32(input_dim))
    w1 = jax.random.uniform(k_w1, (input_dim, proj_head_dim),
                            minval=-scale, maxval=scale, dtype=jnp.float32)
    b1 = jax.random.uniform(k_b1, (proj_head_dim,),
                            minval=-scale, maxval=scale, dtype=jnp.float32)
    w2 = jax.random.uniform(k_w2, (input_dim, proj_head_dim),
                            minval=-scale, maxval=scale, dtype=jnp.float32)
    b2 = jax.random.uniform(k_b2, (proj_head_dim,),
                            minval=-scale, maxval=scale, dtype=jnp.float32)

    loss = contrastive_loss(ri, ri_prime, w1, b1, w2, b2, temperature)
    loss = jax.block_until_ready(loss)

    ref = reference_loss(ri, ri_prime, w1, b1, w2, b2, temperature)
    assert jnp.allclose(loss, ref, rtol=1e-5, atol=1e-5), (loss, ref)

    print("KERNEL_OK")
</pallas_src>

<mosaic_0001>
module attributes {stable_mosaic.version = 11 : i64} {
  func.func @_contrastive_loss_kernel(%arg0: i32, %arg1: memref<8x128xf32, #tpu.memory_space<vmem>>, %arg2: memref<8x128xf32, #tpu.memory_space<vmem>>, %arg3: memref<128x128xf32, #tpu.memory_space<vmem>>, %arg4: memref<128x128xf32, #tpu.memory_space<vmem>>, %arg5: memref<1x128xf32, #tpu.memory_space<vmem>>, %arg6: memref<1x128xf32, #tpu.memory_space<vmem>>, %arg7: memref<1x1xf32, #tpu.memory_space<smem>>, %arg8: memref<8x128xf32, #tpu.memory_space<vmem>>, %arg9: memref<8x128xf32, #tpu.memory_space<vmem>>) attributes {dimension_semantics = [#tpu.dimension_semantics<arbitrary>], iteration_bounds = array<i64: 1>, scalar_prefetch = 0 : i64, scratch_operands = 2 : i64, tpu.core_type = #tpu.core_type<tc>, window_params = [{transform_indices = @transform_0, window_bounds = array<i64: 8, 128>}, {transform_indices = @transform_1, window_bounds = array<i64: 8, 128>}, {transform_indices = @transform_2, window_bounds = array<i64: 128, 128>}, {transform_indices = @transform_3, window_bounds = array<i64: 128, 128>}, {pipeline_mode = #tpu.pipeline_mode<synchronous>, transform_indices = @transform_4, window_bounds = array<i64: 1, 128>}, {pipeline_mode = #tpu.pipeline_mode<synchronous>, transform_indices = @transform_5, window_bounds = array<i64: 1, 128>}, {transform_indices = @transform_6, window_bounds = array<i64: 1, 1>}]} {
    %c0_i32 = arith.constant 0 : i32
    %0 = arith.cmpi eq, %arg0, %c0_i32 : i32
    %1 = arith.extui %0 : i1 to i32
    %c0_i32_0 = arith.constant 0 : i32
    %2 = arith.cmpi ne, %1, %c0_i32_0 : i32
    scf.if %2 {
      %cst_19 = arith.constant 0.000000e+00 : f32
      %18 = vector.broadcast %cst_19 : f32 to vector<8x128xf32>
      %c0_20 = arith.constant 0 : index
      %c0_21 = arith.constant 0 : index
      %19 = vector.load %arg8[%c0_20, %c0_21] : memref<8x128xf32, #tpu.memory_space<vmem>>, vector<8x128xf32>
      tpu.vector_store %arg8[%c0_20, %c0_21], %18 {strides = array<i32>} : memref<8x128xf32, #tpu.memory_space<vmem>>, vector<8x128xf32>,
      %cst_22 = arith.constant 0.000000e+00 : f32
      %20 = vector.broadcast %cst_22 : f32 to vector<8x128xf32>
      %c0_23 = arith.constant 0 : index
      %c0_24 = arith.constant 0 : index
      %21 = vector.load %arg9[%c0_23, %c0_24] : memref<8x128xf32, #tpu.memory_space<vmem>>, vector<8x128xf32>
      tpu.vector_store %arg9[%c0_23, %c0_24], %20 {strides = array<i32>} : memref<8x128xf32, #tpu.memory_space<vmem>>, vector<8x128xf32>,
    } else {
    }
    %c0 = arith.constant 0 : index
    %c0_1 = arith.constant 0 : index
    %3 = vector.load %arg8[%c0, %c0_1] : memref<8x128xf32, #tpu.memory_space<vmem>>, vector<8x128xf32>
    %c0_2 = arith.constant 0 : index
    %c0_3 = arith.constant 0 : index
    %4 = vector.load %arg1[%c0_2, %c0_3] : memref<8x128xf32, #tpu.memory_space<vmem>>, vector<8x128xf32>
    %c0_4 = arith.constant 0 : index
    %c0_5 = arith.constant 0 : index
    %5 = vector.load %arg3[%c0_4, %c0_5] : memref<128x128xf32, #tpu.memory_space<vmem>>, vector<128x128xf32>
    %cst = arith.constant dense<0.000000e+00> : vector<8x128xf32>
    %6 = tpu.matmul %4, %5, %cst {dimension_numbers = #tpu.dot_dimension_numbers<[1], [0], [0], [1], [0, 0, 1, 1], [], []>} : vector<8x128xf32>, vector<128x128xf32>, vector<8x128xf32> -> vector<8x128xf32>
    %7 = arith.addf %3, %6 : vector<8x128xf32>
    %c0_6 = arith.constant 0 : index
    %c0_7 = arith.constant 0 : index
    %8 = vector.load %arg8[%c0_6, %c0_7] : memref<8x128xf32, #tpu.memory_space<vmem>>, vector<8x128xf32>
    tpu.vector_store %arg8[%c0_6, %c0_7], %7 {strides = array<i32>} : memref<8x128xf32, #tpu.memory_space<vmem>>, vector<8x128xf32>,
    %c0_8 = arith.constant 0 : index
    %c0_9 = arith.constant 0 : index
    %9 = vector.load %arg9[%c0_8, %c0_9] : memref<8x128xf32, #tpu.memory_space<vmem>>, vector<8x128xf32>
    %c0_10 = arith.constant 0 : index
    %c0_11 = arith.constant 0 : index
    %10 = vector.load %arg2[%c0_10, %c0_11] : memref<8x128xf32, #tpu.memory_space<vmem>>, vector<8x128xf32>
    %c0_12 = arith.constant 0 : index
    %c0_13 = arith.constant 0 : index
    %11 = vector.load %arg4[%c0_12, %c0_13] : memref<128x128xf32, #tpu.memory_space<vmem>>, vector<128x128xf32>
    %cst_14 = arith.constant dense<0.000000e+00> : vector<8x128xf32>
    %12 = tpu.matmul %10, %11, %cst_14 {dimension_numbers = #tpu.dot_dimension_numbers<[1], [0], [0], [1], [0, 0, 1, 1], [], []>} : vector<8x128xf32>, vector<128x128xf32>, vector<8x128xf32> -> vector<8x128xf32>
    %13 = arith.addf %9, %12 : vector<8x128xf32>
    %c0_15 = arith.constant 0 : index
    %c0_16 = arith.constant 0 : index
    %14 = vector.load %arg9[%c0_15, %c0_16] : memref<8x128xf32, #tpu.memory_space<vmem>>, vector<8x128xf32>
    tpu.vector_store %arg9[%c0_15, %c0_16], %13 {strides = array<i32>} : memref<8x128xf32, #tpu.memory_space<vmem>>, vector<8x128xf32>,
    %c0_i32_17 = arith.constant 0 : i32
    %15 = arith.cmpi eq, %arg0, %c0_i32_17 : i32
    %16 = arith.extui %15 : i1 to i32
    %c0_i32_18 = arith.constant 0 : i32
    %17 = arith.cmpi ne, %16, %c0_i32_18 : i32
    scf.if %17 {
      %c0_19 = arith.constant 0 : index
      %c0_20 = arith.constant 0 : index
      %18 = vector.load %arg8[%c0_19, %c0_20] : memref<8x128xf32, #tpu.memory_space<vmem>>, vector<8x128xf32>
      %c0_21 = arith.constant 0 : index
      %c0_22 = arith.constant 0 : index
      %19 = vector.load %arg5[%c0_21, %c0_22] : memref<1x128xf32, #tpu.memory_space<vmem>>, vector<1x128xf32>
      %20 = vector.broadcast %19 : vector<1x128xf32> to vector<8x128xf32>
      %21 = arith.addf %18, %20 : vector<8x128xf32>
      %cst_23 = arith.constant 0.000000e+00 : f32
      %22 = vector.broadcast %cst_23 : f32 to vector<8x128xf32>
      %23 = arith.maximumf %21, %22 : vector<8x128xf32>
      %c0_24 = arith.constant 0 : index
      %c0_25 = arith.constant 0 : index
      %24 = vector.load %arg9[%c0_24, %c0_25] : memref<8x128xf32, #tpu.memory_space<vmem>>, vector<8x128xf32>
      %c0_26 = arith.constant 0 : index
      %c0_27 = arith.constant 0 : index
      %25 = vector.load %arg6[%c0_26, %c0_27] : memref<1x128xf32, #tpu.memory_space<vmem>>, vector<1x128xf32>
      %26 = vector.broadcast %25 : vector<1x128xf32> to vector<8x128xf32>
      %27 = arith.addf %24, %26 : vector<8x128xf32>
      %cst_28 = arith.constant 0.000000e+00 : f32
      %28 = vector.broadcast %cst_28 : f32 to vector<8x128xf32>
      %29 = arith.maximumf %27, %28 : vector<8x128xf32>
      %cst_29 = arith.constant dense<0.000000e+00> : vector<8x8xf32>
      %30 = tpu.matmul %23, %29, %cst_29 {dimension_numbers = #tpu.dot_dimension_numbers<[1], [1], [0], [0], [0, 0, 1, 0], [], []>} : vector<8x128xf32>, vector<8x128xf32>, vector<8x8xf32> -> vector<8x8xf32>
      %cst_30 = arith.constant 2.000000e+00 : f32
      %31 = vector.broadcast %cst_30 : f32 to vector<8x8xf32>
      %32 = arith.mulf %30, %31 : vector<8x8xf32>
      %33 = math.exp %32 : vector<8x8xf32>
      %cst_31 = arith.constant dense<0.000000e+00> : vector<8xf32>
      %34 = vector.multi_reduction <add>, %33, %cst_31 [1] : vector<8x8xf32> to vector<8xf32>
      %35 = vector.shape_cast %34 : vector<8xf32> to vector<8x1xf32>
      %36 = arith.mulf %23, %29 : vector<8x128xf32>
      %cst_32 = arith.constant dense<0.000000e+00> : vector<8xf32>
      %37 = vector.multi_reduction <add>, %36, %cst_32 [1] : vector<8x128xf32> to vector<8xf32>
      %38 = vector.shape_cast %37 : vector<8xf32> to vector<8x1xf32>
      %cst_33 = arith.constant 2.000000e+00 : f32
      %39 = vector.broadcast %cst_33 : f32 to vector<8x1xf32>
      %40 = arith.mulf %38, %39 : vector<8x1xf32>
      %41 = math.exp %40 : vector<8x1xf32>
      %42 = tpu.reciprocal %35 : vector<8x1xf32> -> vector<8x1xf32>
      %43 = arith.mulf %41, %42 : vector<8x1xf32>
      %cst_34 = arith.constant 0.000000e+00 : f32
      %44 = vector.broadcast %cst_34 : f32 to vector<8x1xf32>
      %45 = arith.maximumf %43, %44 : vector<8x1xf32>
      %cst_35 = arith.constant 1.000000e-07 : f32
      %46 = vector.broadcast %cst_35 : f32 to vector<8x1xf32>
      %47 = arith.addf %45, %46 : vector<8x1xf32>
      %48 = math.log %47 : vector<8x1xf32>
      %49 = vector.shape_cast %48 : vector<8x1xf32> to vector<1x8x1xf32>
      %cst_36 = arith.constant dense<0.000000e+00> : vector<1xf32>
      %50 = vector.multi_reduction <add>, %49, %cst_36 [1, 2] : vector<1x8x1xf32> to vector<1xf32>
      %51 = vector.shape_cast %50 : vector<1xf32> to vector<1x1x1xf32>
      %52 = vector.extract %51[0, 0, 0] : f32 from vector<1x1x1xf32>
      %cst_37 = arith.constant -1.000000e+00 : f32
      %53 = arith.mulf %cst_37, %52 : f32
      %c0_38 = arith.constant 0 : index
      %c0_39 = arith.constant 0 : index
      %54 = memref.load %arg7[%c0_38, %c0_39] : memref<1x1xf32, #tpu.memory_space<smem>>
      memref.store %53, %arg7[%c0_38, %c0_39] : memref<1x1xf32, #tpu.memory_space<smem>>
    } else {
    }
    return
  }
  func.func @transform_0(%arg0: i32) -> (i32, i32) {
    %c0_i32 = arith.constant 0 : i32
    %c0_i32_0 = arith.constant 0 : i32
    return %c0_i32, %arg0 : i32, i32
  }
  func.func @transform_1(%arg0: i32) -> (i32, i32) {
    %c0_i32 = arith.constant 0 : i32
    %c0_i32_0 = arith.constant 0 : i32
    return %c0_i32, %arg0 : i32, i32
  }
  func.func @transform_2(%arg0: i32) -> (i32, i32) {
    %c0_i32 = arith.constant 0 : i32
    %c0_i32_0 = arith.constant 0 : i32
    return %arg0, %c0_i32 : i32, i32
  }
  func.func @transform_3(%arg0: i32) -> (i32, i32) {
    %c0_i32 = arith.constant 0 : i32
    %c0_i32_0 = arith.constant 0 : i32
    return %arg0, %c0_i32 : i32, i32
  }
  func.func @transform_4(%arg0: i32) -> (i32, i32) {
    %c0_i32 = arith.constant 0 : i32
    %c0_i32_0 = arith.constant 0 : i32
    %c0_i32_1 = arith.constant 0 : i32
    return %c0_i32, %c0_i32_0 : i32, i32
  }
  func.func @transform_5(%arg0: i32) -> (i32, i32) {
    %c0_i32 = arith.constant 0 : i32
    %c0_i32_0 = arith.constant 0 : i32
    %c0_i32_1 = arith.constant 0 : i32
    return %c0_i32, %c0_i32_0 : i32, i32
  }
  func.func @transform_6(%arg0: i32) -> (i32, i32) {
    %c0_i32 = arith.constant 0 : i32
    %c0_i32_0 = arith.constant 0 : i32
    %c0_i32_1 = arith.constant 0 : i32
    return %c0_i32, %c0_i32_0 : i32, i32
  }
}

</mosaic_0001>

<llo_original>
// kernel: tpu_custom_call.1
$region0: #{tpu_custom_call.1}
  #allocation0 [shape = 'u32[]', space=smem, size = 0x4, offset = 0x4, fixed_abs, tag = 'smem constant byte address 0x4 - core index']
  #allocation1 [shape = 'u32[72,128]{1,0:T(1,128)}', space=vmem, size = 0x9000, scoped, tag = 'internal scratch']
  #allocation2 [shape = 'f32[8,128]{1,0:T(8,128)}', space=vmem, size = 0x1000, scoped, tag = 'scratch operand']
  #allocation3 [shape = 'f32[8,128]{1,0:T(8,128)}', space=vmem, size = 0x1000, scoped, tag = 'scratch operand']
  %s0 = inlined_call_operand.hbm [shape: f32[8,128], index: 0, kind: input, shape index: {}]
  %s1 = inlined_call_operand.hbm [shape: f32[8,128], index: 1, kind: input, shape index: {}]
  %s2 = inlined_call_operand.hbm [shape: f32[128,128], index: 2, kind: input, shape index: {}]
  %s3 = inlined_call_operand.hbm [shape: f32[128,128], index: 3, kind: input, shape index: {}]
  %s4 = inlined_call_operand.vmem [shape: f32[1,128], index: 4, kind: input, shape index: {}]
  %s5 = inlined_call_operand.vmem [shape: f32[1,128], index: 5, kind: input, shape index: {}]
  %s6 = inlined_call_operand.hbm [shape: f32[1,1], index: 6, kind: output, shape index: {}]
  %s7 = sld [smem:[#allocation0]]
  $region58: #{tpu_custom_call.1} parent=0
    _
  %s9 = ssub.s32 1, %s7
  %s10 = scalar_select 0, %s9, %s7
  $region1: #{tpu_custom_call.1} parent=0
    #allocation4 [shape = 'u8[4096]{0}', space=vmem, size = 0x1000, scoped, tag = 'input window, operand 0, single buffered']
    #allocation5 [shape = 's32[1]{0}', space=sflag, size = 0x4, scoped, tag = 'scoped memory for tpu_custom_call.1']
    #allocation6 [shape = 's32[1]{0}', space=sflag, size = 0x4, scoped, tag = 'scoped memory for tpu_custom_call.1']
    #allocation7 [shape = 'u8[4096]{0}', space=vmem, size = 0x1000, scoped, tag = 'input window, operand 1, single buffered']
    #allocation8 [shape = 's32[1]{0}', space=sflag, size = 0x4, scoped, tag = 'scoped memory for tpu_custom_call.1']
    #allocation9 [shape = 'u8[65536]{0}', space=vmem, size = 0x10000, scoped, tag = 'input window, operand 2, single buffered']
    #allocation10 [shape = 'u8[65536]{0}', space=vmem, size = 0x10000, scoped, tag = 'input window, operand 3, single buffered']
    #allocation11 [shape = 's32[1]{0}', space=sflag, size = 0x4, scoped, tag = 'scoped memory for tpu_custom_call.1']
    #allocation12 [shape = 'u8[512]{0}', space=smem, size = 0x200, scoped, tag = 'output window, operand 0, single buffered']
    %11 = vsyncpa [#allocation5], 0
    %12 = vsyncpa [#allocation8], 0
    %13 = vsyncpa [#allocation11], 0
    %14 = vsyncpa [#allocation6], 0
    // Predicated region
    $region2: #{tpu_custom_call.1} parent=1 // pred_check
      _
    $region3: #{tpu_custom_call.1} parent=1 // pred_check_branch
      %16 = sbr.rel (0) target = $region5
    $region4: #{tpu_custom_call.1} parent=1 // pred_region
      %18 = vsyncadd [#allocation5], 0
      %s20 = sshll.u32 %s0, 4
      %s21 = int_to_ptr.hbm [resolvable:$true] %s20
      %s22 = sshll.u32 [#allocation4], 4
      %s23 = int_to_ptr.vmem [resolvable:$true] %s22
      %25 = dma.hbm_to_vmem [thread:$0]  %s21, 128, %s23, [#allocation5]
    $region5: #{tpu_custom_call.1} parent=1 // pred_fallthru
      _
    // Predicated region
    $region6: #{tpu_custom_call.1} parent=1 // pred_check
      _
    $region7: #{tpu_custom_call.1} parent=1 // pred_check_branch
      %27 = sbr.rel (0) target = $region9
    $region8: #{tpu_custom_call.1} parent=1 // pred_region
      %29 = vsyncadd [#allocation8], 0
      %s31 = sshll.u32 %s1, 4
      %s32 = int_to_ptr.hbm [resolvable:$true] %s31
      %s33 = sshll.u32 [#allocation7], 4
      %s34 = int_to_ptr.vmem [resolvable:$true] %s33
      %36 = dma.hbm_to_vmem [thread:$0]  %s32, 128, %s34, [#allocation8]
    $region9: #{tpu_custom_call.1} parent=1 // pred_fallthru
      _
    // Predicated region
    $region10: #{tpu_custom_call.1} parent=1 // pred_check
      _
    $region11: #{tpu_custom_call.1} parent=1 // pred_check_branch
      %38 = sbr.rel (0) target = $region13
    $region12: #{tpu_custom_call.1} parent=1 // pred_region
      %40 = vsyncadd [#allocation8], 0
      %s41 = sshll.u32 %s2, 4
      %s42 = int_to_ptr.hbm [resolvable:$true] %s41
      %s43 = sshll.u32 [#allocation9], 4
      %s44 = int_to_ptr.vmem [resolvable:$true] %s43
      %49 = dma.hbm_to_vmem [thread:$0]  %s42, 2048, %s44, [#allocation8], 128, 128, 8
    $region13: #{tpu_custom_call.1} parent=1 // pred_fallthru
      _
    // Predicated region
    $region14: #{tpu_custom_call.1} parent=1 // pred_check
      _
    $region15: #{tpu_custom_call.1} parent=1 // pred_check_branch
      %51 = sbr.rel (0) target = $region17
    $region16: #{tpu_custom_call.1} parent=1 // pred_region
      %53 = vsyncadd [#allocation11], 0
      %s54 = sshll.u32 %s3, 4
      %s55 = int_to_ptr.hbm [resolvable:$true] %s54
      %s56 = sshll.u32 [#allocation10], 4
      %s57 = int_to_ptr.vmem [resolvable:$true] %s56
      %62 = dma.hbm_to_vmem [thread:$0]  %s55, 2048, %s57, [#allocation11], 128, 128, 8
    $region17: #{tpu_custom_call.1} parent=1 // pred_fallthru
      _
    // Predicated region
    $region18: #{tpu_custom_call.1} parent=1 // pred_check
      _
    $region19: #{tpu_custom_call.1} parent=1 // pred_check_branch
      %64 = sbr.rel (0) target = $region21
    $region20: #{tpu_custom_call.1} parent=1 // pred_region
      _
    $region21: #{tpu_custom_call.1} parent=1 // pred_fallthru
      _
    // Predicated region
    $region22: #{tpu_custom_call.1} parent=1 // pred_check
      _
    $region23: #{tpu_custom_call.1} parent=1 // pred_check_branch
      %66 = sbr.rel (0) target = $region25
    $region24: #{tpu_custom_call.1} parent=1 // pred_region
      _
    $region25: #{tpu_custom_call.1} parent=1 // pred_fallthru
      _
    // Predicated region
    $region26: #{tpu_custom_call.1} parent=1 // pred_check
      _
    $region27: #{tpu_custom_call.1} parent=1 // pred_check_branch
      %68 = sbr.rel (0) target = $region29
    $region28: #{tpu_custom_call.1} parent=1 // pred_region
      %70 = dma.done [#allocation5], 128
    $region29: #{tpu_custom_call.1} parent=1 // pred_fallthru
      _
    // Predicated region
    $region30: #{tpu_custom_call.1} parent=1 // pred_check
      _
    $region31: #{tpu_custom_call.1} parent=1 // pred_check_branch
      %72 = sbr.rel (0) target = $region33
    $region32: #{tpu_custom_call.1} parent=1 // pred_region
      %74 = dma.done [#allocation8], 128
    $region33: #{tpu_custom_call.1} parent=1 // pred_fallthru
      _
    // Predicated region
    $region34: #{tpu_custom_call.1} parent=1 // pred_check
      _
    $region35: #{tpu_custom_call.1} parent=1 // pred_check_branch
      %76 = sbr.rel (0) target = $region37
    $region36: #{tpu_custom_call.1} parent=1 // pred_region
      %78 = dma.done [#allocation8], 2048
    $region37: #{tpu_custom_call.1} parent=1 // pred_fallthru
      _
    // Predicated region
    $region38: #{tpu_custom_call.1} parent=1 // pred_check
      _
    $region39: #{tpu_custom_call.1} parent=1 // pred_check_branch
      %80 = sbr.rel (0) target = $region41
    $region40: #{tpu_custom_call.1} parent=1 // pred_region
      %82 = dma.done [#allocation11], 2048
    $region41: #{tpu_custom_call.1} parent=1 // pred_fallthru
      _
    %p83 = scmp.eq.s32.totalorder 0, 0
    // Predicated region
    $region42: #{tpu_custom_call.1} parent=1 // pred_check
      %p84 = pneg %p83
    $region43: #{tpu_custom_call.1} parent=1 // pred_check_branch
      %86 = sbr.rel (%p84) target = $region45
    $region44: #{tpu_custom_call.1} parent=1 // pred_region
      %87 = vst [vmem:[#allocation2] sm:$0xff] 0.0
      %88 = vst [vmem:[#allocation3] sm:$0xff] 0.0
    $region45: #{tpu_custom_call.1} parent=1 // pred_fallthru
      _
    %v89 = vld [vmem:[#allocation2] sm:$0xff]
    %v90 = vld [vmem:[#allocation4] sm:$0xff]
    %v91 = vld [vmem:[#allocation9] sm:$0xff]
    %v92 = vld [vmem:[#allocation9 + $0x8] sm:$0xff]
    %v93 = vld [vmem:[#allocation9 + $0x10] sm:$0xff]
    %v94 = vld [vmem:[#allocation9 + $0x18] sm:$0xff]
    %v95 = vld [vmem:[#allocation9 + $0x20] sm:$0xff]
    %v96 = vld [vmem:[#allocation9 + $0x28] sm:$0xff]
    %v97 = vld [vmem:[#allocation9 + $0x30] sm:$0xff]
    %v98 = vld [vmem:[#allocation9 + $0x38] sm:$0xff]
    %v99 = vld [vmem:[#allocation9 + $0x40] sm:$0xff]
    %v100 = vld [vmem:[#allocation9 + $0x48] sm:$0xff]
    %v101 = vld [vmem:[#allocation9 + $0x50] sm:$0xff]
    %v102 = vld [vmem:[#allocation9 + $0x58] sm:$0xff]
    %v103 = vld [vmem:[#allocation9 + $0x60] sm:$0xff]
    %v104 = vld [vmem:[#allocation9 + $0x68] sm:$0xff]
    %v105 = vld [vmem:[#allocation9 + $0x70] sm:$0xff]
    %v106 = vld [vmem:[#allocation9 + $0x78] sm:$0xff]
    %107 = vmatpush.msra.mxu0 %v106
    %108 = vmatpush.msra.mxu0 %v105
    %109 = vmatpush.msra.mxu0 %v104
    %110 = vmatpush.msra.mxu0 %v103
    %111 = vmatpush.msra.mxu0 %v102
    %112 = vmatpush.msra.mxu0 %v101
    %113 = vmatpush.msra.mxu0 %v100
    %114 = vmatpush.msra.mxu0 %v99
    %115 = vmatpush.msra.mxu0 %v98
    %116 = vmatpush.msra.mxu0 %v97
    %117 = vmatpush.msra.mxu0 %v96
    %118 = vmatpush.msra.mxu0 %v95
    %119 = vmatpush.msra.mxu0 %v94
    %120 = vmatpush.msra.mxu0 %v93
    %121 = vmatpush.msra.mxu0 %v92
    %122 = vmatpush.msra.mxu0 %v91
    %123 = vmatmul.f32.gmra.mxu0 %v90
    %v124 = vpop.f32.mrf.mxu0
    %v125 = vadd.f32 0.0, %v124
    %126 = vdwg.mxu0
    %v127 = vadd.f32 %v89, %v125
    %128 = vst [vmem:[#allocation2] sm:$0xff] %v127
    %v129 = vld [vmem:[#allocation3] sm:$0xff]
    %v130 = vld [vmem:[#allocation7] sm:$0xff]
    %v131 = vld [vmem:[#allocation10] sm:$0xff]
    %v132 = vld [vmem:[#allocation10 + $0x8] sm:$0xff]
    %v133 = vld [vmem:[#allocation10 + $0x10] sm:$0xff]
    %v134 = vld [vmem:[#allocation10 + $0x18] sm:$0xff]
    %v135 = vld [vmem:[#allocation10 + $0x20] sm:$0xff]
    %v136 = vld [vmem:[#allocation10 + $0x28] sm:$0xff]
    %v137 = vld [vmem:[#allocation10 + $0x30] sm:$0xff]
    %v138 = vld [vmem:[#allocation10 + $0x38] sm:$0xff]
    %v139 = vld [vmem:[#allocation10 + $0x40] sm:$0xff]
    %v140 = vld [vmem:[#allocation10 + $0x48] sm:$0xff]
    %v141 = vld [vmem:[#allocation10 + $0x50] sm:$0xff]
    %v142 = vld [vmem:[#allocation10 + $0x58] sm:$0xff]
    %v143 = vld [vmem:[#allocation10 + $0x60] sm:$0xff]
    %v144 = vld [vmem:[#allocation10 + $0x68] sm:$0xff]
    %v145 = vld [vmem:[#allocation10 + $0x70] sm:$0xff]
    %v146 = vld [vmem:[#allocation10 + $0x78] sm:$0xff]
    %147 = vmatpush.msra.mxu0 %v146
    %148 = vmatpush.msra.mxu0 %v145
    %149 = vmatpush.msra.mxu0 %v144
    %150 = vmatpush.msra.mxu0 %v143
    %151 = vmatpush.msra.mxu0 %v142
    %152 = vmatpush.msra.mxu0 %v141
    %153 = vmatpush.msra.mxu0 %v140
    %154 = vmatpush.msra.mxu0 %v139
    %155 = vmatpush.msra.mxu0 %v138
    %156 = vmatpush.msra.mxu0 %v137
    %157 = vmatpush.msra.mxu0 %v136
    %158 = vmatpush.msra.mxu0 %v135
    %159 = vmatpush.msra.mxu0 %v134
    %160 = vmatpush.msra.mxu0 %v133
    %161 = vmatpush.msra.mxu0 %v132
    %162 = vmatpush.msra.mxu0 %v131
    %163 = vmatmul.f32.gmra.mxu0 %v130
    %v164 = vpop.f32.mrf.mxu0
    %v165 = vadd.f32 0.0, %v164
    %166 = vdwg.mxu0
    %v167 = vadd.f32 %v129, %v165
    %168 = vst [vmem:[#allocation3] sm:$0xff] %v167
    // Predicated region
    $region46: #{tpu_custom_call.1} parent=1 // pred_check
      %p169 = pneg %p83
    $region47: #{tpu_custom_call.1} parent=1 // pred_check_branch
      %171 = sbr.rel (%p169) target = $region49
    $region48: #{tpu_custom_call.1} parent=1 // pred_region
      %v172 = vld [vmem:[#allocation2] sm:$0xff]
      %v173 = vld [vmem:[%s4] sm:$0x1]
      %v175 = vperm.slane %v173, 0
      %v177 = vadd.f32 %v172, %v175
      %v178 = vmax.f32 %v177, 0.0
      %v179 = vld [vmem:[#allocation3] sm:$0xff]
      %v180 = vld [vmem:[%s5] sm:$0x1]
      %v182 = vperm.slane %v180, 0
      %v184 = vadd.f32 %v179, %v182
      %v185 = vmax.f32 %v184, 0.0
      %186 = vmatpush.xpose.msra.mxu0 0.0
      %187 = vmatpush.xpose.msra.mxu0 0.0
      %188 = vmatpush.xpose.msra.mxu0 0.0
      %189 = vmatpush.xpose.msra.mxu0 0.0
      %190 = vmatpush.xpose.msra.mxu0 0.0
      %191 = vmatpush.xpose.msra.mxu0 0.0
      %192 = vmatpush.xpose.msra.mxu0 0.0
      %193 = vmatpush.xpose.msra.mxu0 0.0
      %194 = vmatpush.xpose.msra.mxu0 0.0
      %195 = vmatpush.xpose.msra.mxu0 0.0
      %196 = vmatpush.xpose.msra.mxu0 0.0
      %197 = vmatpush.xpose.msra.mxu0 0.0
      %198 = vmatpush.xpose.msra.mxu0 0.0
      %199 = vmatpush.xpose.msra.mxu0 0.0
      %200 = vmatpush.xpose.msra.mxu0 0.0
      %201 = vmatpush.xpose.msra.mxu0 %v185
      %202 = vmatmul.f32.gmra.mxu0 %v178
      %v203 = vpop.f32.mrf.mxu0
      %v204 = vadd.f32 0.0, %v203
      %205 = vdwg.mxu0
      %v206 = vmul.f32 %v204, 2.0
      %v207 = vmul.f32 %v206, 1.442695
      %v208 = vpow.pop %v207
      %vm209 = vcmask 64512
      %v210 = vsel %vm209, %v208, 0.0
      %211 = vadd.xlane.f32.xlu0 %v210
      %v212 = vpop.xlane.xlu0 %211
      %v213 = vmul.f32 %v178, %v185
      %214 = vadd.xlane.f32.xlu0 %v213
      %v215 = vpop.xlane.xlu0 %214
      %v216 = vmul.f32 %v215, 2.0
      %v217 = vmul.f32 %v216, 1.442695
      %v218 = vpow.pop %v217
      %v219 = vrcp.pop %v212
      %v220 = vmul.f32 %v212, %v219
      %v221 = vsub.f32 1.0, %v220
      %v222 = vmul.f32 %v219, %v221
      %v223 = vadd.f32 %v219, %v222
      %vm224 = vweird.f32 %v212
      %vm225 = vweird.f32 %v219
      %vm226 = vmor %vm224, %vm225
      %v227 = vsel %vm226, %v219, %v223
      %v228 = vand.u32 2147483647, %v212
      %vm229 = vcmp.eq.f32.partialorder %v228, 8.507059e+37
      %v230 = vand.u32 %v212, 2147483648
      %v231 = vor.u32 1.1754944e-38, %v230
      %v232 = vsel %vm229, %v231, %v227
      %v233 = vmul.f32 %v218, %v232
      %v234 = vmax.f32 %v233, 0.0
      %v235 = vadd.f32 %v234, 1e-07
      %v236 = vlog2.pop %v235
      %v237 = vmul.f32 %v236, 0.6931472
      %vm238 = vcmask 7168
      %v239 = vsel %vm238, %v237, 0.0
      %240 = vadd.xlane.f32.xlu0 %v239
      %v241 = vpop.xlane.xlu0 %240
      %v242 = vrot.slane %v241, 4
      %v243 = vadd.f32 %v241, %v242
      %v244 = vrot.slane %v243, 2
      %v245 = vadd.f32 %v243, %v244
      %v246 = vrot.slane %v245, 1
      %v247 = vadd.f32 %v245, %v246
      %s248 = vtos %v247
      %s249 = smul.f32 %s248, -1.0
      %s250 = scalar_lea.smem [#allocation12], 0
      %251 = sst [smem:[%s250]] %s249
    $region49: #{tpu_custom_call.1} parent=1 // pred_fallthru
      _
    // Predicated region
    $region50: #{tpu_custom_call.1} parent=1 // pred_check
      _
    $region51: #{tpu_custom_call.1} parent=1 // pred_check_branch
      %253 = sbr.rel (0) target = $region53
    $region52: #{tpu_custom_call.1} parent=1 // pred_region
      %255 = vsyncadd [#allocation6], 0
      %s257 = sshll.u32 %s6, 4
      %s258 = int_to_ptr.hbm [resolvable:$true] %s257
      %260 = dma.smem_to_hbm [#allocation12], 16, %s258, [#allocation6]
    $region53: #{tpu_custom_call.1} parent=1 // pred_fallthru
      _
    // Predicated region
    $region54: #{tpu_custom_call.1} parent=1 // pred_check
      _
    $region55: #{tpu_custom_call.1} parent=1 // pred_check_branch
      %262 = sbr.rel (0) target = $region57
    $region56: #{tpu_custom_call.1} parent=1 // pred_region
      %264 = dma.done [#allocation6], 16
    $region57: #{tpu_custom_call.1} parent=1 // pred_fallthru
      _
    %265 = sfence
    %266 = vsyncpa [#allocation5], 1
    %267 = vsyncpa [#allocation8], 1
    %268 = vsyncpa [#allocation11], 1
    %269 = vsyncpa [#allocation6], 1

</llo_original>
